<compile_context>
chip_gen: v6e
topology: v6e:2x2x1
jax: 0.10.0
libtpu: 0.0.40
codegen_flags: <defaults>
</compile_context>

<pallas_src>
import functools
import math

import jax
import jax.numpy as jnp
from jax.experimental import pallas as pl
from jax.experimental.pallas import tpu as pltpu

_LANES = 128       # vreg lane width (last-dim alignment for hidden features)
_SUBLANES = 8      # vreg sublane count (batch-tile alignment)
_PIN_SINGLE_BUFFER_BYTES = 1 << 20   # Buffered(1) only matters for big params


def _round_up(n, m):
    return ((n + m - 1) // m) * m


def _cdiv(a, b):
    return -(-a // b)


def _vmem_capacity_bytes():
    try:
        return int(pltpu.get_tpu_info().vmem_capacity_bytes)
    except Exception:
        return 64 * 1024 * 1024   # conservative default: v7x per-TC VMEM


# ---------------------------------------------------------------------------
# Parameters: init + one-time padding (hoisted out of the forward path).
# ---------------------------------------------------------------------------
def init_qnetwork_params(key, num_input, num_output, num_hidden=(64,)):
    """Deterministic init mimicking nn.Linear (uniform +-1/sqrt(fan_in))."""
    layer_n = (num_input, *num_hidden, num_output)
    params = []
    for i in range(len(layer_n) - 1):
        fan_in, fan_out = layer_n[i], layer_n[i + 1]
        key, kw, kb = jax.random.split(key, 3)
        bound = 1.0 / math.sqrt(fan_in)
        # Stored as (in, out) = transpose of PyTorch's (out, in).
        w = jax.random.uniform(kw, (fan_in, fan_out), jnp.float32, -bound, bound)
        b = jax.random.uniform(kb, (fan_out,), jnp.float32, -bound, bound)
        params.append((w, b))
    return params


def prepare_qnetwork_params(params, *, use_bf16=False):
    """Pad *hidden* feature dims to 128 lanes, once.

    Input/output feature dims stay unpadded (they are the only ones that touch
    HBM every call). Padded hidden lanes are exact zeros: 0 pre-activation,
    0 through ReLU, multiplied by zero weight rows in the next layer, so the
    result is bit-identical. Returns a flat [W1, b1, ..., WL, bL] list.
    """
    num_layers = len(params)
    feats = [params[0][0].shape[0]] + [w.shape[1] for w, _ in params]
    feats_p = list(feats)
    for i in range(1, num_layers):            # hidden dims only
        feats_p[i] = _round_up(feats[i], _LANES)

    flat = []
    for li, (w, b) in enumerate(params):
        w_dtype = jnp.bfloat16 if use_bf16 else w.dtype   # opt-in bf16 matmul
        wp = jnp.zeros((feats_p[li], feats_p[li + 1]), w_dtype)
        wp = wp.at[: w.shape[0], : w.shape[1]].set(w.astype(w_dtype))
        bp = jnp.zeros((1, feats_p[li + 1]), jnp.float32)  # bias/ReLU stay f32
        bp = bp.at[0, : b.shape[0]].set(b.astype(jnp.float32))
        flat += [wp, bp]
    return flat


# ---------------------------------------------------------------------------
# Kernel.
# ---------------------------------------------------------------------------
def _qnet_kernel(num_layers, x_ref, *refs):
    """refs = (w1_ref, b1_ref, ..., wL_ref, bL_ref, o_ref)."""
    o_ref = refs[-1]
    param_refs = refs[:-1]

    h = x_ref[...].astype(jnp.float32)
    for layer in range(num_layers):
        w = param_refs[2 * layer][...]
        b = param_refs[2 * layer + 1][...]
        # Matmul operands take the weight dtype (bf16 on the opt-in path);
        # accumulation, bias add and ReLU stay f32 on every TPU generation
        # (v5e VPU/EUP have no bf16).
        h = jnp.dot(h.astype(w.dtype), w,
                    preferred_element_type=jnp.float32) + b
        if layer < num_layers - 1:
            h = jnp.maximum(h, 0.0)   # ReLU between hidden layers only
    o_ref[...] = h.astype(o_ref.dtype)


# ---------------------------------------------------------------------------
# Forward wrapper.
# ---------------------------------------------------------------------------
def qnetwork_forward(x, prepared_params, *, max_tile_m=2048, core_parallel=False):
    """x: (B, num_input).  prepared_params: output of prepare_qnetwork_params."""
    num_layers = len(prepared_params) // 2
    batch, num_input = x.shape
    assert prepared_params[0].shape[0] == num_input, "input width mismatch"
    num_output = prepared_params[-1].shape[1]
    feats_p = [num_input] + [prepared_params[2 * li].shape[1]
                             for li in range(num_layers)]

    # ---- batch tile: balanced so the last tile isn't mostly padding --------
    n_tiles = max(1, _cdiv(batch, max_tile_m))
    tm = _round_up(_cdiv(batch, n_tiles), _SUBLANES)
    if core_parallel and batch >= 2 * _SUBLANES:
        # Make sure there are >=2 grid steps so both TensorCores get work.
        tm = min(tm, _round_up(_cdiv(batch, 2), _SUBLANES))

    # ---- explicit VMEM budget (v7x: 64 MiB per TensorCore) -----------------
    param_bytes = sum(int(p.size) * p.dtype.itemsize for p in prepared_params)
    single_buffer_params = param_bytes >= _PIN_SINGLE_BUFFER_BYTES
    param_buffers = 1 if single_buffer_params else 2
    budget = int(0.8 * _vmem_capacity_bytes())

    def vmem_needed(tile_m):
        act = 2 * tile_m * (num_input * x.dtype.itemsize + num_output * 4)
        inter = 2 * tile_m * max(feats_p) * 4     # intermediate f32 activations
        return param_bytes * param_buffers + act + inter

    while vmem_needed(tm) > budget and tm > _SUBLANES:
        tm = max(_SUBLANES, _round_up(tm // 2, _SUBLANES))
    if vmem_needed(tm) > budget:
        # TODO(synk): layer-pipelined fallback (pltpu.emit_pipeline streaming
        # each W_l from HBM) for parameter sets that do not fit in VMEM.
        raise NotImplementedError("QNetwork parameters exceed the VMEM budget")

    padded_b = _round_up(batch, tm)
    xp = x
    if padded_b != batch:
        xp = jnp.zeros((padded_b, num_input), x.dtype).at[:batch].set(x)

    # ---- BlockSpecs: tile the batch, pin the parameters --------------------
    # Constant index_map on weights/biases => they stay VMEM-resident across
    # batch tiles (verify with a trace; pipelining optimization, not a
    # documented guarantee).
    pin_mode = pl.Buffered(1) if single_buffer_params else None

    def _pinned_spec(shape):
        if pin_mode is None:
            return pl.BlockSpec(shape, lambda i: (0, 0))
        return pl.BlockSpec(shape, lambda i: (0, 0), pipeline_mode=pin_mode)

    # x / out blocks span the full (unpadded) feature dims -> no HBM padding.
    in_specs = [pl.BlockSpec((tm, num_input), lambda i: (i, 0))]
    for li in range(num_layers):
        in_specs.append(_pinned_spec((feats_p[li], feats_p[li + 1])))
        in_specs.append(_pinned_spec((1, feats_p[li + 1])))
    out_spec = pl.BlockSpec((tm, num_output), lambda i: (i, 0))

    dim_sem = (pltpu.CORE_PARALLEL,) if core_parallel else ("parallel",)

    out = pl.pallas_call(
        functools.partial(_qnet_kernel, num_layers),
        out_shape=jax.ShapeDtypeStruct((padded_b, num_output), x.dtype),
        grid=(padded_b // tm,),
        in_specs=in_specs,
        out_specs=out_spec,
        compiler_params=pltpu.CompilerParams(
            dimension_semantics=dim_sem,
            vmem_limit_bytes=int(min(budget, 2 * vmem_needed(tm) + (16 << 20))),
        ),
    )(xp, *prepared_params)

    if padded_b != batch:
        out = out[:batch]
    return out


# ---------------------------------------------------------------------------
# Pure-JAX reference (matches the PyTorch forward).
# ---------------------------------------------------------------------------
def qnetwork_reference(x, params):
    h = x
    for i, (w, b) in enumerate(params):
        h = h @ w + b
        if i < len(params) - 1:
            h = jnp.maximum(h, 0.0)
    return h


if __name__ == "__main__":
    key = jax.random.PRNGKey(0)
    key, kx1, kx2 = jax.random.split(key, 3)

    num_input, num_output, num_hidden = 32, 16, (64,)
    params = init_qnetwork_params(key, num_input, num_output, num_hidden)
    prepared = prepare_qnetwork_params(params)     # pad once, reuse every call

    # Latency-regime batch (grid = 1, no batch padding, no output slice).
    x_small = jax.random.normal(kx1, (8, num_input), jnp.float32)
    out_small = jax.block_until_ready(qnetwork_forward(x_small, prepared))
    ref_small = qnetwork_reference(x_small, params)
    assert out_small.shape == (8, num_output), out_small.shape
    assert jnp.allclose(out_small, ref_small, atol=1e-5, rtol=1e-5), \
        float(jnp.max(jnp.abs(out_small - ref_small)))

    # Multi-tile batch (exercises batch tiling, row padding and the slice).
    x_big = jax.random.normal(kx2, (20, num_input), jnp.float32)
    out_big = jax.block_until_ready(
        qnetwork_forward(x_big, prepared, max_tile_m=8))
    ref_big = qnetwork_reference(x_big, params)
    assert out_big.shape == (20, num_output), out_big.shape
    assert jnp.allclose(out_big, ref_big, atol=1e-5, rtol=1e-5), \
        float(jnp.max(jnp.abs(out_big - ref_big)))

    print("KERNEL_OK")
</pallas_src>

<mosaic_0001>
module attributes {stable_mosaic.version = 11 : i64} {
  func.func @_qnet_kernel(%arg0: i32, %arg1: memref<8x32xf32, #tpu.memory_space<vmem>>, %arg2: memref<32x128xf32, #tpu.memory_space<vmem>>, %arg3: memref<1x128xf32, #tpu.memory_space<vmem>>, %arg4: memref<128x16xf32, #tpu.memory_space<vmem>>, %arg5: memref<1x16xf32, #tpu.memory_space<vmem>>, %arg6: memref<8x16xf32, #tpu.memory_space<vmem>>) attributes {dimension_semantics = [#tpu.dimension_semantics<parallel>], iteration_bounds = array<i64: 1>, scalar_prefetch = 0 : i64, scratch_operands = 0 : i64, tpu.core_type = #tpu.core_type<tc>, window_params = [{transform_indices = @transform_0, window_bounds = array<i64: 8, 32>}, {pipeline_mode = #tpu.pipeline_mode<synchronous>, transform_indices = @transform_1, window_bounds = array<i64: 32, 128>}, {pipeline_mode = #tpu.pipeline_mode<synchronous>, transform_indices = @transform_2, window_bounds = array<i64: 1, 128>}, {pipeline_mode = #tpu.pipeline_mode<synchronous>, transform_indices = @transform_3, window_bounds = array<i64: 128, 16>}, {pipeline_mode = #tpu.pipeline_mode<synchronous>, transform_indices = @transform_4, window_bounds = array<i64: 1, 16>}, {transform_indices = @transform_5, window_bounds = array<i64: 8, 16>}]} {
    %c0 = arith.constant 0 : index
    %c0_0 = arith.constant 0 : index
    %0 = vector.load %arg1[%c0, %c0_0] : memref<8x32xf32, #tpu.memory_space<vmem>>, vector<8x32xf32>
    %c0_1 = arith.constant 0 : index
    %c0_2 = arith.constant 0 : index
    %1 = vector.load %arg2[%c0_1, %c0_2] : memref<32x128xf32, #tpu.memory_space<vmem>>, vector<32x128xf32>
    %c0_3 = arith.constant 0 : index
    %c0_4 = arith.constant 0 : index
    %2 = vector.load %arg3[%c0_3, %c0_4] : memref<1x128xf32, #tpu.memory_space<vmem>>, vector<1x128xf32>
    %cst = arith.constant dense<0.000000e+00> : vector<8x128xf32>
    %3 = tpu.matmul %0, %1, %cst {dimension_numbers = #tpu.dot_dimension_numbers<[1], [0], [0], [1], [0, 0, 1, 1], [], []>} : vector<8x32xf32>, vector<32x128xf32>, vector<8x128xf32> -> vector<8x128xf32>
    %4 = vector.broadcast %2 : vector<1x128xf32> to vector<8x128xf32>
    %5 = arith.addf %3, %4 : vector<8x128xf32>
    %cst_5 = arith.constant 0.000000e+00 : f32
    %6 = vector.broadcast %cst_5 : f32 to vector<8x128xf32>
    %7 = arith.maximumf %5, %6 : vector<8x128xf32>
    %c0_6 = arith.constant 0 : index
    %c0_7 = arith.constant 0 : index
    %8 = vector.load %arg4[%c0_6, %c0_7] : memref<128x16xf32, #tpu.memory_space<vmem>>, vector<128x16xf32>
    %c0_8 = arith.constant 0 : index
    %c0_9 = arith.constant 0 : index
    %9 = vector.load %arg5[%c0_8, %c0_9] : memref<1x16xf32, #tpu.memory_space<vmem>>, vector<1x16xf32>
    %cst_10 = arith.constant dense<0.000000e+00> : vector<8x16xf32>
    %10 = tpu.matmul %7, %8, %cst_10 {dimension_numbers = #tpu.dot_dimension_numbers<[1], [0], [0], [1], [0, 0, 1, 1], [], []>} : vector<8x128xf32>, vector<128x16xf32>, vector<8x16xf32> -> vector<8x16xf32>
    %11 = vector.broadcast %9 : vector<1x16xf32> to vector<8x16xf32>
    %12 = arith.addf %10, %11 : vector<8x16xf32>
    %c0_11 = arith.constant 0 : index
    %c0_12 = arith.constant 0 : index
    %13 = vector.load %arg6[%c0_11, %c0_12] : memref<8x16xf32, #tpu.memory_space<vmem>>, vector<8x16xf32>
    tpu.vector_store %arg6[%c0_11, %c0_12], %12 {strides = array<i32>} : memref<8x16xf32, #tpu.memory_space<vmem>>, vector<8x16xf32>,
    return
  }
  func.func @transform_0(%arg0: i32) -> (i32, i32) {
    %c0_i32 = arith.constant 0 : i32
    %c0_i32_0 = arith.constant 0 : i32
    return %arg0, %c0_i32 : i32, i32
  }
  func.func @transform_1(%arg0: i32) -> (i32, i32) {
    %c0_i32 = arith.constant 0 : i32
    %c0_i32_0 = arith.constant 0 : i32
    %c0_i32_1 = arith.constant 0 : i32
    return %c0_i32, %c0_i32_0 : i32, i32
  }
  func.func @transform_2(%arg0: i32) -> (i32, i32) {
    %c0_i32 = arith.constant 0 : i32
    %c0_i32_0 = arith.constant 0 : i32
    %c0_i32_1 = arith.constant 0 : i32
    return %c0_i32, %c0_i32_0 : i32, i32
  }
  func.func @transform_3(%arg0: i32) -> (i32, i32) {
    %c0_i32 = arith.constant 0 : i32
    %c0_i32_0 = arith.constant 0 : i32
    %c0_i32_1 = arith.constant 0 : i32
    return %c0_i32, %c0_i32_0 : i32, i32
  }
  func.func @transform_4(%arg0: i32) -> (i32, i32) {
    %c0_i32 = arith.constant 0 : i32
    %c0_i32_0 = arith.constant 0 : i32
    %c0_i32_1 = arith.constant 0 : i32
    return %c0_i32, %c0_i32_0 : i32, i32
  }
  func.func @transform_5(%arg0: i32) -> (i32, i32) {
    %c0_i32 = arith.constant 0 : i32
    %c0_i32_0 = arith.constant 0 : i32
    return %arg0, %c0_i32 : i32, i32
  }
}

</mosaic_0001>

<llo_original>
// kernel: tpu_custom_call.1
$region0: #{tpu_custom_call.1}
  #allocation0 [shape = 'u32[]', space=smem, size = 0x4, offset = 0x4, fixed_abs, tag = 'smem constant byte address 0x4 - core index']
  #allocation1 [shape = 'u32[144,128]{1,0:T(1,128)}', space=vmem, size = 0x12000, scoped, tag = 'internal scratch']
  %s0 = inlined_call_operand.vmem [shape: f32[8,32], index: 0, kind: input, shape index: {}]
  %s1 = inlined_call_operand.vmem [shape: f32[32,128], index: 1, kind: input, shape index: {}]
  %s2 = inlined_call_operand.vmem [shape: f32[1,128], index: 2, kind: input, shape index: {}]
  %s3 = inlined_call_operand.vmem [shape: f32[128,16], index: 3, kind: input, shape index: {}]
  %s4 = inlined_call_operand.vmem [shape: f32[1,16], index: 4, kind: input, shape index: {}]
  %s5 = inlined_call_operand.hbm [shape: f32[8,16], index: 5, kind: output, shape index: {}]
  %s6 = sld [smem:[#allocation0]]
  $region30: #{tpu_custom_call.1} parent=0
    _
  %s8 = ssub.s32 1, %s6
  %s9 = scalar_select 0, %s8, %s6
  $region1: #{tpu_custom_call.1} parent=0
    #allocation2 [shape = 'u8[4096]{0}', space=vmem, size = 0x1000, scoped, tag = 'output window, operand 0, single buffered']
    #allocation3 [shape = 's32[1]{0}', space=sflag, size = 0x4, scoped, tag = 'scoped memory for tpu_custom_call.1']
    %10 = vsyncpa [#allocation3], 0
    // Predicated region
    $region2: #{tpu_custom_call.1} parent=1 // pred_check
      _
    $region3: #{tpu_custom_call.1} parent=1 // pred_check_branch
      %12 = sbr.rel (0) target = $region5
    $region4: #{tpu_custom_call.1} parent=1 // pred_region
      _
    $region5: #{tpu_custom_call.1} parent=1 // pred_fallthru
      _
    // Predicated region
    $region6: #{tpu_custom_call.1} parent=1 // pred_check
      _
    $region7: #{tpu_custom_call.1} parent=1 // pred_check_branch
      %14 = sbr.rel (0) target = $region9
    $region8: #{tpu_custom_call.1} parent=1 // pred_region
      _
    $region9: #{tpu_custom_call.1} parent=1 // pred_fallthru
      _
    // Predicated region
    $region10: #{tpu_custom_call.1} parent=1 // pred_check
      _
    $region11: #{tpu_custom_call.1} parent=1 // pred_check_branch
      %16 = sbr.rel (0) target = $region13
    $region12: #{tpu_custom_call.1} parent=1 // pred_region
      _
    $region13: #{tpu_custom_call.1} parent=1 // pred_fallthru
      _
    // Predicated region
    $region14: #{tpu_custom_call.1} parent=1 // pred_check
      _
    $region15: #{tpu_custom_call.1} parent=1 // pred_check_branch
      %18 = sbr.rel (0) target = $region17
    $region16: #{tpu_custom_call.1} parent=1 // pred_region
      _
    $region17: #{tpu_custom_call.1} parent=1 // pred_fallthru
      _
    // Predicated region
    $region18: #{tpu_custom_call.1} parent=1 // pred_check
      _
    $region19: #{tpu_custom_call.1} parent=1 // pred_check_branch
      %20 = sbr.rel (0) target = $region21
    $region20: #{tpu_custom_call.1} parent=1 // pred_region
      _
    $region21: #{tpu_custom_call.1} parent=1 // pred_fallthru
      _
    %v21 = vld [vmem:[%s0] sm:$0xff]
    %v22 = vld [vmem:[%s1] sm:$0xff]
    %v23 = vld [vmem:[%s1 + $0x8] sm:$0xff]
    %v24 = vld [vmem:[%s1 + $0x10] sm:$0xff]
    %v25 = vld [vmem:[%s1 + $0x18] sm:$0xff]
    %v26 = vld [vmem:[%s2] sm:$0x1]
    %v28 = vlaneseq
    %v29 = vshrl.u32 %v28, 7
    %v30 = vsub.s32 0, %v29
    %v31 = vrot.slane %v26, %v30
    %vm33 = vcmask 261120
    %v35 = vsel %vm33, %v21, 0
    %37 = vmatprep.subr.mxu0 0.0
    %38 = vmatpush1.msra.mxu0 0.0
    %39 = vmatprep.subr.mxu0 0.0
    %40 = vmatpush1.msra.mxu0 0.0
    %41 = vmatprep.subr.mxu0 0.0
    %42 = vmatpush1.msra.mxu0 0.0
    %43 = vmatprep.subr.mxu0 0.0
    %44 = vmatpush1.msra.mxu0 0.0
    %45 = vmatprep.subr.mxu0 0.0
    %46 = vmatpush1.msra.mxu0 0.0
    %47 = vmatprep.subr.mxu0 0.0
    %48 = vmatpush1.msra.mxu0 0.0
    %49 = vmatprep.subr.mxu0 0.0
    %50 = vmatpush1.msra.mxu0 0.0
    %51 = vmatprep.subr.mxu0 0.0
    %52 = vmatpush1.msra.mxu0 0.0
    %53 = vmatprep.subr.mxu0 0.0
    %54 = vmatpush1.msra.mxu0 0.0
    %55 = vmatprep.subr.mxu0 0.0
    %56 = vmatpush1.msra.mxu0 0.0
    %57 = vmatprep.subr.mxu0 0.0
    %58 = vmatpush1.msra.mxu0 0.0
    %59 = vmatprep.subr.mxu0 0.0
    %60 = vmatpush1.msra.mxu0 0.0
    %61 = vmatprep.subr.mxu0 0.0
    %62 = vmatpush1.msra.mxu0 %v25
    %63 = vmatprep.subr.mxu0 0.0
    %64 = vmatpush1.msra.mxu0 %v24
    %65 = vmatprep.subr.mxu0 0.0
    %66 = vmatpush1.msra.mxu0 %v23
    %67 = vmatprep.subr.mxu0 0.0
    %68 = vmatpush1.msra.mxu0 %v22
    %69 = vmatprep.subr.mxu0 0.0
    %70 = vmatpush2.msra.mxu0 0.0
    %71 = vmatprep.subr.mxu0 0.0
    %72 = vmatpush2.msra.mxu0 0.0
    %73 = vmatprep.subr.mxu0 0.0
    %74 = vmatpush2.msra.mxu0 0.0
    %75 = vmatprep.subr.mxu0 0.0
    %76 = vmatpush2.msra.mxu0 0.0
    %77 = vmatprep.subr.mxu0 0.0
    %78 = vmatpush2.msra.mxu0 0.0
    %79 = vmatprep.subr.mxu0 0.0
    %80 = vmatpush2.msra.mxu0 0.0
    %81 = vmatprep.subr.mxu0 0.0
    %82 = vmatpush2.msra.mxu0 0.0
    %83 = vmatprep.subr.mxu0 0.0
    %84 = vmatpush2.msra.mxu0 0.0
    %85 = vmatprep.subr.mxu0 0.0
    %86 = vmatpush2.msra.mxu0 0.0
    %87 = vmatprep.subr.mxu0 0.0
    %88 = vmatpush2.msra.mxu0 0.0
    %89 = vmatprep.subr.mxu0 0.0
    %90 = vmatpush2.msra.mxu0 0.0
    %91 = vmatprep.subr.mxu0 0.0
    %92 = vmatpush2.msra.mxu0 0.0
    %93 = vmatprep.subr.mxu0 0.0
    %94 = vmatpush2.msra.mxu0 0.0
    %95 = vmatprep.subr.mxu0 0.0
    %96 = vmatpush2.msra.mxu0 0.0
    %97 = vmatprep.subr.mxu0 0.0
    %98 = vmatpush2.msra.mxu0 0.0
    %99 = vmatprep.subr.mxu0 0.0
    %100 = vmatpush2.msra.mxu0 0.0
    %101 = vmatprep.mubr.f32.mxu0 0.0
    %102 = vmatmul.mubr.f32.gmra.mxu0 %v35
    %v103 = vpop.f32.mrf.mxu0
    %v104 = vadd.f32 %v31, %v103
    %v105 = vpop.f32.mrf.mxu0
    %106 = vdwg.mxu0
    %v107 = vmax.f32 %v104, 0.0
    %v108 = vld [vmem:[%s3] sm:$0xff]
    %v109 = vld [vmem:[%s3 + $0x8] sm:$0xff]
    %v110 = vld [vmem:[%s3 + $0x10] sm:$0xff]
    %v111 = vld [vmem:[%s3 + $0x18] sm:$0xff]
    %v112 = vld [vmem:[%s3 + $0x20] sm:$0xff]
    %v113 = vld [vmem:[%s3 + $0x28] sm:$0xff]
    %v114 = vld [vmem:[%s3 + $0x30] sm:$0xff]
    %v115 = vld [vmem:[%s3 + $0x38] sm:$0xff]
    %v116 = vld [vmem:[%s3 + $0x40] sm:$0xff]
    %v117 = vld [vmem:[%s3 + $0x48] sm:$0xff]
    %v118 = vld [vmem:[%s3 + $0x50] sm:$0xff]
    %v119 = vld [vmem:[%s3 + $0x58] sm:$0xff]
    %v120 = vld [vmem:[%s3 + $0x60] sm:$0xff]
    %v121 = vld [vmem:[%s3 + $0x68] sm:$0xff]
    %v122 = vld [vmem:[%s3 + $0x70] sm:$0xff]
    %v123 = vld [vmem:[%s3 + $0x78] sm:$0xff]
    %v124 = vld [vmem:[%s4] sm:$0x1]
    %v126 = vlaneseq
    %v127 = vshrl.u32 %v126, 7
    %v128 = vsub.s32 0, %v127
    %v129 = vrot.slane %v124, %v128
    %131 = vmatprep.subr.mxu0 0.0
    %132 = vmatpush1.msra.mxu0 %v123
    %133 = vmatprep.subr.mxu0 0.0
    %134 = vmatpush1.msra.mxu0 %v122
    %135 = vmatprep.subr.mxu0 0.0
    %136 = vmatpush1.msra.mxu0 %v121
    %137 = vmatprep.subr.mxu0 0.0
    %138 = vmatpush1.msra.mxu0 %v120
    %139 = vmatprep.subr.mxu0 0.0
    %140 = vmatpush1.msra.mxu0 %v119
    %141 = vmatprep.subr.mxu0 0.0
    %142 = vmatpush1.msra.mxu0 %v118
    %143 = vmatprep.subr.mxu0 0.0
    %144 = vmatpush1.msra.mxu0 %v117
    %145 = vmatprep.subr.mxu0 0.0
    %146 = vmatpush1.msra.mxu0 %v116
    %147 = vmatprep.subr.mxu0 0.0
    %148 = vmatpush1.msra.mxu0 %v115
    %149 = vmatprep.subr.mxu0 0.0
    %150 = vmatpush1.msra.mxu0 %v114
    %151 = vmatprep.subr.mxu0 0.0
    %152 = vmatpush1.msra.mxu0 %v113
    %153 = vmatprep.subr.mxu0 0.0
    %154 = vmatpush1.msra.mxu0 %v112
    %155 = vmatprep.subr.mxu0 0.0
    %156 = vmatpush1.msra.mxu0 %v111
    %157 = vmatprep.subr.mxu0 0.0
    %158 = vmatpush1.msra.mxu0 %v110
    %159 = vmatprep.subr.mxu0 0.0
    %160 = vmatpush1.msra.mxu0 %v109
    %161 = vmatprep.subr.mxu0 0.0
    %162 = vmatpush1.msra.mxu0 %v108
    %163 = vmatprep.subr.mxu0 0.0
    %164 = vmatpush2.msra.mxu0 0.0
    %165 = vmatprep.subr.mxu0 0.0
    %166 = vmatpush2.msra.mxu0 0.0
    %167 = vmatprep.subr.mxu0 0.0
    %168 = vmatpush2.msra.mxu0 0.0
    %169 = vmatprep.subr.mxu0 0.0
    %170 = vmatpush2.msra.mxu0 0.0
    %171 = vmatprep.subr.mxu0 0.0
    %172 = vmatpush2.msra.mxu0 0.0
    %173 = vmatprep.subr.mxu0 0.0
    %174 = vmatpush2.msra.mxu0 0.0
    %175 = vmatprep.subr.mxu0 0.0
    %176 = vmatpush2.msra.mxu0 0.0
    %177 = vmatprep.subr.mxu0 0.0
    %178 = vmatpush2.msra.mxu0 0.0
    %179 = vmatprep.subr.mxu0 0.0
    %180 = vmatpush2.msra.mxu0 0.0
    %181 = vmatprep.subr.mxu0 0.0
    %182 = vmatpush2.msra.mxu0 0.0
    %183 = vmatprep.subr.mxu0 0.0
    %184 = vmatpush2.msra.mxu0 0.0
    %185 = vmatprep.subr.mxu0 0.0
    %186 = vmatpush2.msra.mxu0 0.0
    %187 = vmatprep.subr.mxu0 0.0
    %188 = vmatpush2.msra.mxu0 0.0
    %189 = vmatprep.subr.mxu0 0.0
    %190 = vmatpush2.msra.mxu0 0.0
    %191 = vmatprep.subr.mxu0 0.0
    %192 = vmatpush2.msra.mxu0 0.0
    %193 = vmatprep.subr.mxu0 0.0
    %194 = vmatpush2.msra.mxu0 0.0
    %195 = vmatprep.mubr.f32.mxu0 0.0
    %196 = vmatmul.mubr.f32.gmra.mxu0 %v107
    %v197 = vpop.f32.mrf.mxu0
    %v198 = vadd.f32 %v129, %v197
    %v199 = vpop.f32.mrf.mxu0
    %200 = vdwg.mxu0
    %vm201 = vcmask 130048
    %202 = vst.msk [vmem:[#allocation2] sm:$0xff] %vm201, %v198
    // Predicated region
    $region22: #{tpu_custom_call.1} parent=1 // pred_check
      _
    $region23: #{tpu_custom_call.1} parent=1 // pred_check_branch
      %204 = sbr.rel (0) target = $region25
    $region24: #{tpu_custom_call.1} parent=1 // pred_region
      %s206 = ssub.s32 128, 128
      %207 = vsyncadd [#allocation3], %s206
      %s209 = sshll.u32 [#allocation2], 4
      %s210 = int_to_ptr.vmem [resolvable:$true] %s209
      %212 = dma.vmem_to_hbm [thread:$0]  %s210, 128, %s5, [#allocation3]
    $region25: #{tpu_custom_call.1} parent=1 // pred_fallthru
      _
    // Predicated region
    $region26: #{tpu_custom_call.1} parent=1 // pred_check
      _
    $region27: #{tpu_custom_call.1} parent=1 // pred_check_branch
      %214 = sbr.rel (0) target = $region29
    $region28: #{tpu_custom_call.1} parent=1 // pred_region
      %215 = dma.done [#allocation3], 128
    $region29: #{tpu_custom_call.1} parent=1 // pred_fallthru
      _
    %216 = vsyncpa [#allocation3], 1

</llo_original>
